<compile_context>
chip_gen: v6e
topology: v6e:2x2x1
jax: 0.10.0
libtpu: 0.0.40
codegen_flags: <defaults>
</compile_context>

<pallas_src>
import math

import jax
import jax.numpy as jnp
from jax.experimental import pallas as pl
from jax.experimental.pallas import tpu as pltpu


def _round_up(a: int, m: int) -> int:
    return -(-a // m) * m


def _cat_pe_kernel(freq_ref, base_ref, x_ref, o_ref):
    """One row-tile: o[:, :d_x] = x ; o[:, d_x:] = sin(base + row0 * freq).

    freq_ref : (1, d_model) f32      -- per-column frequency (grid-resident)
    base_ref : (tile_s, d_model) f32 -- r*freq + phase, grid-step invariant (resident)
    x_ref    : (tile_s, d_x)
    o_ref    : (tile_s, d_x + d_model)
    """
    tile_s, d_x = x_ref.shape

    # Absolute sequence position of row 0 of this tile.
    row0 = (pl.program_id(0) * tile_s).astype(jnp.float32)

    # pe[r, c] = sin((row0 + r) * freq[c] + phase[c])
    #          = sin(base[r, c] + row0 * freq[c])       (cos via phase = pi/2)
    # One broadcast FMA + one EUP sin per element; the iota*freq + phase part is
    # hoisted into base_ref (computed once in the wrapper, DMA'd once, resident).
    pe = jnp.sin(base_ref[...] + row0 * freq_ref[...])

    # Two stores: both lane-dense when d_x % 128 == 0 (common case); for a
    # misaligned concat boundary this only pays a masked store on the boundary
    # vreg column group -- never a full-tile in-register concat + VMEM temp.
    o_ref[:, :d_x] = x_ref[...]
    o_ref[:, d_x:] = pe.astype(o_ref.dtype)


def cat_positional_encoding(
    x: jax.Array,
    d_model: int,
    max_len: int = 5000,
    *,
    xla_fallback_below: int = 0,
) -> jax.Array:
    """x: [seq_len, embedding_dim] -> [seq_len, embedding_dim + d_model]."""
    seq_len, d_x = x.shape
    if d_model % 2 != 0:
        raise ValueError("d_model must be even (sin/cos column interleave)")
    if seq_len > max_len:
        raise ValueError(f"seq_len={seq_len} exceeds max_len={max_len} (pe buffer bound)")
    d_out = d_x + d_model
    itemsize = jnp.dtype(x.dtype).itemsize

    # Per-column frequency / phase (computed once, outside the kernel).
    half = jnp.exp(
        jnp.arange(0, d_model, 2, dtype=jnp.float32) * (-math.log(10000.0) / d_model)
    )                                                         # (d_model//2,)
    freq = jnp.repeat(half, 2)                                # col c -> half[c // 2]
    phase = jnp.tile(jnp.array([0.0, math.pi / 2.0], jnp.float32), d_model // 2)

    if seq_len < xla_fallback_below:
        # Tiny sequences: pallas_call launch + grid-step overhead dominates; a
        # fused XLA compute+concat is cheaper. (Off by default so the Pallas
        # path is always exercised unless the caller opts in.)
        pos = jnp.arange(seq_len, dtype=jnp.float32)[:, None]
        pe = jnp.sin(pos * freq[None, :] + phase[None, :]).astype(x.dtype)
        return jnp.concatenate([x, pe], axis=1)

    # ---- row-tile size ------------------------------------------------------
    # Sublane packing: 8 rows for 32-bit, 16 for bf16.
    sub = 16 if x.dtype == jnp.bfloat16 else 8
    seq_padded = _round_up(seq_len, sub)
    # VMEM bytes per tile row: double-buffered x + out tiles, double-buffered
    # resident f32 base table, plus one f32 pe temp.
    row_bytes = 2 * (d_x + d_out) * itemsize + 3 * d_model * 4
    vmem_budget = 24 * 1024 * 1024            # comfortably under the 32 MiB limit below
    rows_by_vmem = max(sub, (vmem_budget // row_bytes) // sub * sub)
    tile_s = min(2048, rows_by_vmem, seq_padded)
    # v7x has 2 TensorCores/chip: for large sequences keep at least 2 grid steps so
    # the "parallel" grid axis can shard across both cores (costs at most one extra
    # ~0.35 us step on single-TC v5e/v6e).
    if seq_padded >= 1024:
        tile_s = min(tile_s, _round_up(-(-seq_padded // 2), sub))
    tile_s = int(max(sub, tile_s))

    grid = (pl.cdiv(seq_len, tile_s),)

    # Grid-step-invariant PE base: base[r, c] = r * freq[c] + phase[c].
    base = (
        jnp.arange(tile_s, dtype=jnp.float32)[:, None] * freq[None, :] + phase[None, :]
    )                                                         # (tile_s, d_model) f32
    freq2d = freq[None, :]                                    # (1, d_model) f32

    return pl.pallas_call(
        _cat_pe_kernel,
        out_shape=jax.ShapeDtypeStruct((seq_len, d_out), x.dtype),
        grid=grid,
        in_specs=[
            pl.BlockSpec((1, d_model), lambda i: (0, 0)),        # freq row (resident)
            pl.BlockSpec((tile_s, d_model), lambda i: (0, 0)),   # PE base table (resident)
            pl.BlockSpec((tile_s, d_x), lambda i: (i, 0)),       # x row tile
        ],
        out_specs=pl.BlockSpec((tile_s, d_out), lambda i: (i, 0)),
        compiler_params=pltpu.CompilerParams(
            # Row tiles are independent -> shard the grid across TensorCores.
            dimension_semantics=("parallel",),
            vmem_limit_bytes=32 * 1024 * 1024,
        ),
        cost_estimate=pl.CostEstimate(
            flops=2 * seq_len * d_model,                         # broadcast FMA per PE element
            transcendentals=seq_len * d_model,                   # one sin per PE element
            bytes_accessed=seq_len * (d_x + d_out) * itemsize + (tile_s + 1) * d_model * 4,
        ),
    )(freq2d, base, x)


def _reference(x: jax.Array, d_model: int, max_len: int = 5000) -> jax.Array:
    # Pure-JAX mirror of the PyTorch module (verification only).
    position = jnp.arange(max_len, dtype=jnp.float32)[:, None]
    div_term = jnp.exp(
        jnp.arange(0, d_model, 2, dtype=jnp.float32) * (-math.log(10000.0) / d_model)
    )
    pe = jnp.zeros((max_len, d_model), dtype=jnp.float32)
    pe = pe.at[:, 0::2].set(jnp.sin(position * div_term))
    pe = pe.at[:, 1::2].set(jnp.cos(position * div_term))
    return jnp.concatenate([x, pe[: x.shape[0]]], axis=1)


if __name__ == "__main__":
    key = jax.random.PRNGKey(0)

    # Small demo shape: seq_len=8, embedding_dim=d_model=128 (lane-aligned concat
    # boundary -> both stores dense / unmasked).
    seq_len, d_model = 8, 128
    x = jax.random.normal(key, (seq_len, d_model), dtype=jnp.float32)
    out = jax.block_until_ready(cat_positional_encoding(x, d_model))
    ref = _reference(x, d_model)
    assert out.shape == (seq_len, 2 * d_model), out.shape
    assert jnp.allclose(out, ref, atol=1e-4, rtol=1e-5), "mismatch vs reference (small)"

    # Partial-tile / larger-position check: seq_len not a multiple of the sublane
    # packing, positions up to ~300 (exercises the phase-trick rounding and the
    # masked writeback of the out-of-bounds tail rows).
    seq_len2, d_model2, d_x2 = 300, 64, 128
    x2 = jax.random.normal(jax.random.fold_in(key, 1), (seq_len2, d_x2), dtype=jnp.float32)
    out2 = jax.block_until_ready(cat_positional_encoding(x2, d_model2))
    ref2 = _reference(x2, d_model2)
    assert out2.shape == (seq_len2, d_x2 + d_model2), out2.shape
    assert jnp.allclose(out2, ref2, atol=2e-4, rtol=1e-5), "mismatch vs reference (partial tile)"

    print("KERNEL_OK")
</pallas_src>

<mosaic_0001>
module attributes {stable_mosaic.version = 11 : i64} {
  func.func @_cat_pe_kernel(%arg0: i32, %arg1: memref<1x128xf32, #tpu.memory_space<vmem>>, %arg2: memref<8x128xf32, #tpu.memory_space<vmem>>, %arg3: memref<8x128xf32, #tpu.memory_space<vmem>>, %arg4: memref<8x256xf32, #tpu.memory_space<vmem>>) attributes {dimension_semantics = [#tpu.dimension_semantics<parallel>], iteration_bounds = array<i64: 1>, scalar_prefetch = 0 : i64, scratch_operands = 0 : i64, tpu.core_type = #tpu.core_type<tc>, window_params = [{pipeline_mode = #tpu.pipeline_mode<synchronous>, transform_indices = @transform_0, window_bounds = array<i64: 1, 128>}, {pipeline_mode = #tpu.pipeline_mode<synchronous>, transform_indices = @transform_1, window_bounds = array<i64: 8, 128>}, {transform_indices = @transform_2, window_bounds = array<i64: 8, 128>}, {transform_indices = @transform_3, window_bounds = array<i64: 8, 256>}]} {
    %c8_i32 = arith.constant 8 : i32
    %0 = arith.muli %arg0, %c8_i32 : i32
    %1 = arith.sitofp %0 : i32 to f32
    %c0 = arith.constant 0 : index
    %c0_0 = arith.constant 0 : index
    %2 = vector.load %arg2[%c0, %c0_0] : memref<8x128xf32, #tpu.memory_space<vmem>>, vector<8x128xf32>
    %c0_1 = arith.constant 0 : index
    %c0_2 = arith.constant 0 : index
    %3 = vector.load %arg1[%c0_1, %c0_2] : memref<1x128xf32, #tpu.memory_space<vmem>>, vector<1x128xf32>
    %4 = vector.broadcast %1 : f32 to vector<1x128xf32>
    %5 = arith.mulf %4, %3 : vector<1x128xf32>
    %6 = vector.broadcast %5 : vector<1x128xf32> to vector<8x128xf32>
    %7 = arith.addf %2, %6 : vector<8x128xf32>
    %8 = math.sin %7 : vector<8x128xf32>
    %c0_3 = arith.constant 0 : index
    %c0_4 = arith.constant 0 : index
    %9 = vector.load %arg3[%c0_3, %c0_4] : memref<8x128xf32, #tpu.memory_space<vmem>>, vector<8x128xf32>
    %c0_5 = arith.constant 0 : index
    %c0_6 = arith.constant 0 : index
    %10 = vector.load %arg4[%c0_5, %c0_6] : memref<8x256xf32, #tpu.memory_space<vmem>>, vector<8x128xf32>
    tpu.vector_store %arg4[%c0_5, %c0_6], %9 {strides = array<i32>} : memref<8x256xf32, #tpu.memory_space<vmem>>, vector<8x128xf32>,
    %c0_7 = arith.constant 0 : index
    %c128 = arith.constant 128 : index
    %11 = vector.load %arg4[%c0_7, %c128] : memref<8x256xf32, #tpu.memory_space<vmem>>, vector<8x128xf32>
    tpu.vector_store %arg4[%c0_7, %c128], %8 {strides = array<i32>} : memref<8x256xf32, #tpu.memory_space<vmem>>, vector<8x128xf32>,
    return
  }
  func.func @transform_0(%arg0: i32) -> (i32, i32) {
    %c0_i32 = arith.constant 0 : i32
    %c0_i32_0 = arith.constant 0 : i32
    %c0_i32_1 = arith.constant 0 : i32
    return %c0_i32, %c0_i32_0 : i32, i32
  }
  func.func @transform_1(%arg0: i32) -> (i32, i32) {
    %c0_i32 = arith.constant 0 : i32
    %c0_i32_0 = arith.constant 0 : i32
    %c0_i32_1 = arith.constant 0 : i32
    return %c0_i32, %c0_i32_0 : i32, i32
  }
  func.func @transform_2(%arg0: i32) -> (i32, i32) {
    %c0_i32 = arith.constant 0 : i32
    %c0_i32_0 = arith.constant 0 : i32
    return %arg0, %c0_i32 : i32, i32
  }
  func.func @transform_3(%arg0: i32) -> (i32, i32) {
    %c0_i32 = arith.constant 0 : i32
    %c0_i32_0 = arith.constant 0 : i32
    return %arg0, %c0_i32 : i32, i32
  }
}

</mosaic_0001>

<llo_original>
// kernel: tpu_custom_call.1
$region0: #{tpu_custom_call.1}
  #allocation0 [shape = 'u32[]', space=smem, size = 0x4, offset = 0x4, fixed_abs, tag = 'smem constant byte address 0x4 - core index']
  #allocation1 [shape = 'u32[144,128]{1,0:T(1,128)}', space=vmem, size = 0x12000, scoped, tag = 'internal scratch']
  %s0 = inlined_call_operand.hbm [shape: f32[1,128], index: 0, kind: input, shape index: {}]
  %s1 = inlined_call_operand.hbm [shape: f32[8,128], index: 1, kind: input, shape index: {}]
  %s2 = inlined_call_operand.hbm [shape: f32[8,128], index: 2, kind: input, shape index: {}]
  %s3 = inlined_call_operand.hbm [shape: f32[8,256], index: 3, kind: output, shape index: {}]
  %s4 = sld [smem:[#allocation0]]
  $region34: #{tpu_custom_call.1} parent=0
    _
  %s6 = ssub.s32 1, %s4
  %s7 = scalar_select 0, %s6, %s4
  $region1: #{tpu_custom_call.1} parent=0
    #allocation2 [shape = 'u8[512]{0}', space=vmem, size = 0x400, scoped, tag = 'input window, operand 0, single buffered']
    #allocation3 [shape = 's32[1]{0}', space=sflag, size = 0x4, scoped, tag = 'scoped memory for tpu_custom_call.1']
    #allocation4 [shape = 's32[1]{0}', space=sflag, size = 0x4, scoped, tag = 'scoped memory for tpu_custom_call.1']
    #allocation5 [shape = 'u8[4096]{0}', space=vmem, size = 0x1000, scoped, tag = 'input window, operand 1, single buffered']
    #allocation6 [shape = 's32[1]{0}', space=sflag, size = 0x4, scoped, tag = 'scoped memory for tpu_custom_call.1']
    #allocation7 [shape = 'u8[4096]{0}', space=vmem, size = 0x1000, scoped, tag = 'input window, operand 2, single buffered']
    #allocation8 [shape = 'u8[8192]{0}', space=vmem, size = 0x2000, scoped, tag = 'output window, operand 0, single buffered']
    %8 = vsyncpa [#allocation3], 0
    %9 = vsyncpa [#allocation6], 0
    %10 = vsyncpa [#allocation4], 0
    // Predicated region
    $region2: #{tpu_custom_call.1} parent=1 // pred_check
      _
    $region3: #{tpu_custom_call.1} parent=1 // pred_check_branch
      %12 = sbr.rel (0) target = $region5
    $region4: #{tpu_custom_call.1} parent=1 // pred_region
      %s14 = ssub.s32 16, 16
      %15 = vsyncadd [#allocation3], %s14
      %s17 = sshll.u32 [#allocation2], 4
      %s18 = int_to_ptr.vmem [resolvable:$true] %s17
      %20 = dma.hbm_to_vmem [thread:$0]  %s0, 16, %s18, [#allocation3]
    $region5: #{tpu_custom_call.1} parent=1 // pred_fallthru
      _
    // Predicated region
    $region6: #{tpu_custom_call.1} parent=1 // pred_check
      _
    $region7: #{tpu_custom_call.1} parent=1 // pred_check_branch
      %22 = sbr.rel (0) target = $region9
    $region8: #{tpu_custom_call.1} parent=1 // pred_region
      %s24 = ssub.s32 128, 128
      %25 = vsyncadd [#allocation6], %s24
      %s27 = sshll.u32 [#allocation5], 4
      %s28 = int_to_ptr.vmem [resolvable:$true] %s27
      %30 = dma.hbm_to_vmem [thread:$0]  %s1, 128, %s28, [#allocation6]
    $region9: #{tpu_custom_call.1} parent=1 // pred_fallthru
      _
    // Predicated region
    $region10: #{tpu_custom_call.1} parent=1 // pred_check
      _
    $region11: #{tpu_custom_call.1} parent=1 // pred_check_branch
      %32 = sbr.rel (0) target = $region13
    $region12: #{tpu_custom_call.1} parent=1 // pred_region
      %s34 = ssub.s32 128, 128
      %35 = vsyncadd [#allocation6], %s34
      %s37 = sshll.u32 [#allocation7], 4
      %s38 = int_to_ptr.vmem [resolvable:$true] %s37
      %40 = dma.hbm_to_vmem [thread:$0]  %s2, 128, %s38, [#allocation6]
    $region13: #{tpu_custom_call.1} parent=1 // pred_fallthru
      _
    // Predicated region
    $region14: #{tpu_custom_call.1} parent=1 // pred_check
      _
    $region15: #{tpu_custom_call.1} parent=1 // pred_check_branch
      %42 = sbr.rel (0) target = $region17
    $region16: #{tpu_custom_call.1} parent=1 // pred_region
      %43 = dma.done [#allocation3], 16
    $region17: #{tpu_custom_call.1} parent=1 // pred_fallthru
      _
    // Predicated region
    $region18: #{tpu_custom_call.1} parent=1 // pred_check
      _
    $region19: #{tpu_custom_call.1} parent=1 // pred_check_branch
      %45 = sbr.rel (0) target = $region21
    $region20: #{tpu_custom_call.1} parent=1 // pred_region
      %46 = dma.done [#allocation6], 128
    $region21: #{tpu_custom_call.1} parent=1 // pred_fallthru
      _
    // Predicated region
    $region22: #{tpu_custom_call.1} parent=1 // pred_check
      _
    $region23: #{tpu_custom_call.1} parent=1 // pred_check_branch
      %48 = sbr.rel (0) target = $region25
    $region24: #{tpu_custom_call.1} parent=1 // pred_region
      %49 = dma.done [#allocation6], 128
    $region25: #{tpu_custom_call.1} parent=1 // pred_fallthru
      _
    %s50 = smul.u32 0, 8
    %s51 = scvt.s32.f32 %s50
    %v52 = vld [vmem:[#allocation5] sm:$0xff]
    %v53 = vld [vmem:[#allocation2] sm:$0x1]
    %v54 = vstv %s51
    %v55 = vmul.f32 %v54, %v53
    %v57 = vlaneseq
    %v58 = vshrl.u32 %v57, 7
    %v59 = vsub.s32 0, %v58
    %v60 = vrot.slane %v55, %v59
    %v62 = vadd.f32 %v52, %v60
    %v63 = vand.u32 2147483647, %v62
    %vm64 = vcmp.le.f32.partialorder %v63, 0.7853982
    %vm65 = vcmp.lt.s32.totalorder %v62, 0
    %v66 = vand.u32 %v62, 2139095040
    %v67 = vshrl.u32 %v66, 23
    %v68 = vsub.s32 %v67, 127
    %v69 = vand.u32 2147483647, %v62
    %v70 = vand.u32 %v69, 8388607
    %v71 = vor.u32 %v70, 8388608
    %v72 = vsub.s32 0, %v71
    %v73 = vadd.s32 %v68, 1
    %vm74 = vcmp.gt.s32.totalorder %v73, 0
    %v75 = vsel %vm74, %v73, 0
    %v76 = vshrl.u32 %v75, 5
    %v77 = vand.u32 %v75, 31
    %v78 = vsub.s32 32, %v77
    %v79 = vshrl.u32 683565275, %v78
    %v80 = vshll.u32 683565275, %v77
    %v81 = vshrl.u32 2475754826, %v78
    %v82 = vor.u32 %v80, %v81
    %v83 = vshll.u32 2475754826, %v77
    %v84 = vshrl.u32 2131351028, %v78
    %v85 = vor.u32 %v83, %v84
    %v86 = vshll.u32 2131351028, %v77
    %v87 = vshrl.u32 2102212464, %v78
    %v88 = vor.u32 %v86, %v87
    %v89 = vshll.u32 2102212464, %v77
    %v90 = vshrl.u32 920167782, %v78
    %v91 = vor.u32 %v89, %v90
    %v92 = vshll.u32 920167782, %v77
    %v93 = vshrl.u32 1326507024, %v78
    %v94 = vor.u32 %v92, %v93
    %vm95 = vcmp.lt.s32.totalorder %v76, 1
    %vm96 = vcmp.lt.s32.totalorder %v76, 2
    %vm97 = vcmp.lt.s32.totalorder %v76, 3
    %vm98 = vcmp.lt.s32.totalorder %v76, 4
    %v99 = vsel %vm95, %v79, %v82
    %v100 = vsel %vm98, %v88, 2102212464
    %v101 = vsel %vm97, %v85, %v100
    %v102 = vsel %vm96, %v99, %v101
    %v103 = vsel %vm95, %v82, %v85
    %v104 = vsel %vm98, %v91, 920167782
    %v105 = vsel %vm97, %v88, %v104
    %v106 = vsel %vm96, %v103, %v105
    %v107 = vsel %vm95, %v85, %v88
    %v108 = vsel %vm98, %v94, 1326507024
    %v109 = vsel %vm97, %v91, %v108
    %v110 = vsel %vm96, %v107, %v109
    %v111 = vshll.u32 %v71, 8
    %v112 = vmul.u32.u64.compose %v111, %v110
    %v113 = vextract.low.u32 %v112
    %v114 = vextract.high.u32 %v112
    %v115 = vmul.u32.u64.compose %v111, %v106
    %v116 = vextract.low.u32 %v115
    %v117 = vextract.high.u32 %v115
    %v118 = vmul.u32 %v111, %v102
    %v119 = vadd.s32 %v114, %v116
    %vm120 = vc.u32 %v114, %v116
    %v121 = vadd.s32 %v117, 1
    %v122 = vsel %vm120, %v121, %v117
    %v123 = vadd.s32 %v118, %v122
    %v124 = vadd.s32 %v123, 536870912
    %v125 = vshrl.u32 %v124, 30
    %v126 = vshll.u32 %v125, 30
    %v127 = vsub.s32 %v123, %v126
    %vm128 = vcmp.lt.s32.totalorder %v127, 0
    %v129 = vsub.s32 0, %v127
    %v130 = vsel %vm128, %v129, %v127
    %v131 = vclz %v130
    %v132 = vsub.s32 %v131, 2
    %vm133 = vcmp.gt.s32.totalorder 0, %v132
    %v134 = vsel %vm133, 0, %v132
    %v135 = vsub.s32 32, %v134
    %v136 = vshll.u32 %v127, %v134
    %v137 = vshrl.u32 %v119, %v135
    %v138 = vor.u32 %v136, %v137
    %v139 = vsub.s32 4294967266, %v134
    %v140 = vadd.s32 %v139, 127
    %v141 = vshll.u32 %v140, 23
    %v142 = vor.u32 4788187, %v141
    %v143 = vand.u32 2147483647, %v142
    %v145 = vcvt.s32.f32 %v138
    %v146 = vmul.f32 %v145, %v143
    %v147 = vxor.u32 %v146, 2147483648
    %v148 = vsel %vm65, %v147, %v146
    %v149 = vsub.s32 4, %v125
    %v150 = vsel %vm65, %v149, %v125
    %v151 = vsel %vm64, %v62, %v148
    %v152 = vsel %vm64, 0, %v150
    %v153 = vcosq.f32.pop %v151
    %v154 = vsinq.f32.pop %v151
    %vm155 = vweird.f32 %v62
    %v156 = vadd.s32 %v152, 3
    %v157 = vand.u32 %v156, 3
    %vm158 = vcmp.lt.s32.totalorder %v157, 2
    %vm159 = vcmp.eq.s32.totalorder %v157, 0
    %v160 = vxor.u32 %v154, 2147483648
    %v161 = vsel %vm159, %v153, %v160
    %vm162 = vcmp.eq.s32.totalorder %v157, 2
    %v163 = vxor.u32 %v153, 2147483648
    %v164 = vsel %vm162, %v163, %v154
    %v165 = vsel %vm158, %v161, %v164
    %v166 = vsel %vm155, nan, %v165
    %v167 = vld [vmem:[#allocation7] sm:$0xff]
    %168 = vst [vmem:[#allocation8] sm:$0xff] %v167
    %169 = vst [vmem:[#allocation8 + $0x8] sm:$0xff] %v166
    // Predicated region
    $region26: #{tpu_custom_call.1} parent=1 // pred_check
      _
    $region27: #{tpu_custom_call.1} parent=1 // pred_check_branch
      %171 = sbr.rel (0) target = $region29
    $region28: #{tpu_custom_call.1} parent=1 // pred_region
      %s173 = ssub.s32 256, 256
      %174 = vsyncadd [#allocation4], %s173
      %s176 = sshll.u32 [#allocation8], 4
      %s177 = int_to_ptr.vmem [resolvable:$true] %s176
      %179 = dma.vmem_to_hbm [thread:$0]  %s177, 256, %s3, [#allocation4]
    $region29: #{tpu_custom_call.1} parent=1 // pred_fallthru
      _
    // Predicated region
    $region30: #{tpu_custom_call.1} parent=1 // pred_check
      _
    $region31: #{tpu_custom_call.1} parent=1 // pred_check_branch
      %181 = sbr.rel (0) target = $region33
    $region32: #{tpu_custom_call.1} parent=1 // pred_region
      %182 = dma.done [#allocation4], 256
    $region33: #{tpu_custom_call.1} parent=1 // pred_fallthru
      _
    %183 = vsyncpa [#allocation3], 1
    %184 = vsyncpa [#allocation6], 1
    %185 = vsyncpa [#allocation4], 1

</llo_original>
